<compile_context>
chip_gen: v7x
topology: tpu7x:2x2x1
jax: 0.10.0
libtpu: 0.0.40
codegen_flags: <defaults>
</compile_context>

<pallas_src>
import jax
import jax.numpy as jnp
from jax.experimental import pallas as pl
from jax.experimental.pallas import tpu as pltpu

LEAKY_SLOPE = 0.01          # PyTorch nn.LeakyReLU default negative_slope
LANE = 128
MAX_TILE_B = 512            # batch-tile cap; fits v7x's smaller VMEM comfortably


def _round_up(x, m):
    return ((x + m - 1) // m) * m


def _leaky_relu_f32(x):
    # Keep in f32: v5e's VPU has no bf16 path; f32 elementwise is cheap everywhere.
    return jnp.where(x >= 0, x, LEAKY_SLOPE * x)


def mlp_kernel(x_ref,
               w1_ref, b1_ref,
               w2_ref, b2_ref,
               w3_ref, b3_ref,
               w4_ref, b4_ref,
               o_ref):
    """One batch tile of the 4-layer MLP. bf16 MXU operands, f32 accumulation."""
    h = jnp.dot(x_ref[...], w1_ref[...],
                preferred_element_type=jnp.float32) + b1_ref[...]
    h = _leaky_relu_f32(h)

    h = jnp.dot(h.astype(jnp.bfloat16), w2_ref[...],
                preferred_element_type=jnp.float32) + b2_ref[...]
    h = _leaky_relu_f32(h)

    h = jnp.dot(h.astype(jnp.bfloat16), w3_ref[...],
                preferred_element_type=jnp.float32) + b3_ref[...]
    h = _leaky_relu_f32(h)

    out = jnp.dot(h.astype(jnp.bfloat16), w4_ref[...],
                  preferred_element_type=jnp.float32) + b4_ref[...]
    o_ref[...] = out.astype(o_ref.dtype)


def net_forward(x, params, *, tile_b=None):
    """x: (B, n_feature) f32. params = (w1,b1,w2,b2,w3,b3,w4,b4), biases (1, out)."""
    w1, b1, w2, b2, w3, b3, w4, b4 = params
    B, n_feature = x.shape
    n_h1, n_h2, n_h3, n_out = w1.shape[1], w2.shape[1], w3.shape[1], w4.shape[1]

    # Lane-pad every contraction/output dim to a multiple of 128.
    Fp = _round_up(n_feature, LANE)
    H1p = _round_up(n_h1, LANE)
    H2p = _round_up(n_h2, LANE)
    H3p = _round_up(n_h3, LANE)
    Op = _round_up(n_out, LANE)

    # Batch tile: multiple of 16 (bf16 sublane packing), capped for VMEM.
    if tile_b is None:
        tile_b = min(MAX_TILE_B, _round_up(B, 16))
    Bp = _round_up(B, tile_b)
    grid_b = Bp // tile_b

    def pad2(a, rows, cols):
        return jnp.pad(a, ((0, rows - a.shape[0]), (0, cols - a.shape[1])))

    x_p = pad2(x, Bp, Fp).astype(jnp.bfloat16)
    w1_p = pad2(w1, Fp, H1p).astype(jnp.bfloat16)
    w2_p = pad2(w2, H1p, H2p).astype(jnp.bfloat16)
    w3_p = pad2(w3, H2p, H3p).astype(jnp.bfloat16)
    w4_p = pad2(w4, H3p, Op).astype(jnp.bfloat16)
    b1_p = pad2(b1, 1, H1p).astype(jnp.float32)
    b2_p = pad2(b2, 1, H2p).astype(jnp.float32)
    b3_p = pad2(b3, 1, H3p).astype(jnp.float32)
    b4_p = pad2(b4, 1, Op).astype(jnp.float32)

    # Batch-tiled x/out; weights & biases pinned at block (0, 0) -> VMEM-resident.
    x_spec = pl.BlockSpec((tile_b, Fp), lambda i: (i, 0))
    out_spec = pl.BlockSpec((tile_b, Op), lambda i: (i, 0))
    resident = lambda shape: pl.BlockSpec(shape, lambda i: (0, 0))

    # Advisory cost estimate for XLA's scheduler.
    flops = 2 * Bp * (Fp * H1p + H1p * H2p + H2p * H3p + H3p * Op)
    bytes_accessed = (
        x_p.size * 2
        + (w1_p.size + w2_p.size + w3_p.size + w4_p.size) * 2
        + (b1_p.size + b2_p.size + b3_p.size + b4_p.size) * 4
        + Bp * Op * 4
    )
    cost = pl.CostEstimate(flops=flops, transcendentals=0,
                           bytes_accessed=bytes_accessed)

    # VMEM budget: double-buffered x/out tiles + resident weights/biases +
    # live f32 intermediates, with 2x headroom; clamped to be v7x-safe.
    vmem_bytes = (
        2 * tile_b * Fp * 2                                   # x tiles (bf16, 2 bufs)
        + 2 * tile_b * Op * 4                                 # out tiles (f32, 2 bufs)
        + 2 * (Fp * H1p + H1p * H2p + H2p * H3p + H3p * Op) * 2  # weights (bf16)
        + (H1p + H2p + H3p + Op) * 4                          # biases (f32)
        + 2 * tile_b * max(H1p, H2p, H3p, Op) * 4             # live intermediates
    )
    vmem_limit = int(min(max(2 * vmem_bytes, 4 * 1024 * 1024), 48 * 1024 * 1024))

    out_padded = pl.pallas_call(
        mlp_kernel,
        out_shape=jax.ShapeDtypeStruct((Bp, Op), jnp.float32),
        grid=(grid_b,),
        in_specs=[
            x_spec,
            resident((Fp, H1p)), resident((1, H1p)),
            resident((H1p, H2p)), resident((1, H2p)),
            resident((H2p, H3p)), resident((1, H3p)),
            resident((H3p, Op)), resident((1, Op)),
        ],
        out_specs=out_spec,
        compiler_params=pltpu.CompilerParams(
            dimension_semantics=("parallel",),
            vmem_limit_bytes=vmem_limit,
        ),
        cost_estimate=cost,
    )(x_p, w1_p, b1_p, w2_p, b2_p, w3_p, b3_p, w4_p, b4_p)

    return out_padded[:B, :n_out]


def init_params(key, n_feature, n_hidden1, n_hidden2, n_hidden3, n_output):
    """Deterministic init mimicking PyTorch Linear (uniform +/- 1/sqrt(fan_in))."""
    dims = [(n_feature, n_hidden1),
            (n_hidden1, n_hidden2),
            (n_hidden2, n_hidden3),
            (n_hidden3, n_output)]
    params = []
    for fan_in, fan_out in dims:
        key, kw, kb = jax.random.split(key, 3)
        bound = 1.0 / jnp.sqrt(fan_in)
        w = jax.random.uniform(kw, (fan_in, fan_out), jnp.float32, -bound, bound)
        b = jax.random.uniform(kb, (1, fan_out), jnp.float32, -bound, bound)
        params += [w, b]
    return tuple(params)


def reference_forward(x, params):
    """Reference with the same bf16-operand / f32-accumulate recipe as the kernel."""
    w1, b1, w2, b2, w3, b3, w4, b4 = params

    def lin(h, w, b):
        return jnp.dot(h.astype(jnp.bfloat16), w.astype(jnp.bfloat16),
                       preferred_element_type=jnp.float32) + b

    h = _leaky_relu_f32(lin(x, w1, b1))
    h = _leaky_relu_f32(lin(h, w2, b2))
    h = _leaky_relu_f32(lin(h, w3, b3))
    return lin(h, w4, b4)


if __name__ == "__main__":
    # Small, module-consistent shapes. NOTE: at this toy scale an XLA fusion
    # would beat the Pallas launch; the kernel pays off once B is large enough
    # to keep the batch grid / MXU busy.
    B, n_feature, n_hidden1, n_hidden2, n_hidden3, n_output = 8, 32, 64, 64, 32, 4

    key = jax.random.PRNGKey(0)
    key, kx = jax.random.split(key)
    x = jax.random.normal(kx, (B, n_feature), dtype=jnp.float32)

    params = init_params(key, n_feature, n_hidden1, n_hidden2, n_hidden3, n_output)

    out = net_forward(x, params)
    out = jax.block_until_ready(out)

    ref = reference_forward(x, params)
    assert out.shape == (B, n_output)
    assert jnp.allclose(out, ref, atol=2e-2, rtol=2e-2), (
        f"max abs err {jnp.max(jnp.abs(out - ref))}")

    print("KERNEL_OK")
</pallas_src>

<mosaic_0001>
module attributes {stable_mosaic.version = 11 : i64} {
  func.func @mlp_kernel(%arg0: i32, %arg1: memref<16x128xbf16, #tpu.memory_space<vmem>>, %arg2: memref<128x128xbf16, #tpu.memory_space<vmem>>, %arg3: memref<1x128xf32, #tpu.memory_space<vmem>>, %arg4: memref<128x128xbf16, #tpu.memory_space<vmem>>, %arg5: memref<1x128xf32, #tpu.memory_space<vmem>>, %arg6: memref<128x128xbf16, #tpu.memory_space<vmem>>, %arg7: memref<1x128xf32, #tpu.memory_space<vmem>>, %arg8: memref<128x128xbf16, #tpu.memory_space<vmem>>, %arg9: memref<1x128xf32, #tpu.memory_space<vmem>>, %arg10: memref<16x128xf32, #tpu.memory_space<vmem>>) attributes {dimension_semantics = [#tpu.dimension_semantics<parallel>], iteration_bounds = array<i64: 1>, scalar_prefetch = 0 : i64, scratch_operands = 0 : i64, tpu.core_type = #tpu.core_type<tc>, window_params = [{transform_indices = @transform_0, window_bounds = array<i64: 16, 128>}, {pipeline_mode = #tpu.pipeline_mode<synchronous>, transform_indices = @transform_1, window_bounds = array<i64: 128, 128>}, {pipeline_mode = #tpu.pipeline_mode<synchronous>, transform_indices = @transform_2, window_bounds = array<i64: 1, 128>}, {pipeline_mode = #tpu.pipeline_mode<synchronous>, transform_indices = @transform_3, window_bounds = array<i64: 128, 128>}, {pipeline_mode = #tpu.pipeline_mode<synchronous>, transform_indices = @transform_4, window_bounds = array<i64: 1, 128>}, {pipeline_mode = #tpu.pipeline_mode<synchronous>, transform_indices = @transform_5, window_bounds = array<i64: 128, 128>}, {pipeline_mode = #tpu.pipeline_mode<synchronous>, transform_indices = @transform_6, window_bounds = array<i64: 1, 128>}, {pipeline_mode = #tpu.pipeline_mode<synchronous>, transform_indices = @transform_7, window_bounds = array<i64: 128, 128>}, {pipeline_mode = #tpu.pipeline_mode<synchronous>, transform_indices = @transform_8, window_bounds = array<i64: 1, 128>}, {transform_indices = @transform_9, window_bounds = array<i64: 16, 128>}]} {
    %c0 = arith.constant 0 : index
    %c0_0 = arith.constant 0 : index
    %0 = vector.load %arg1[%c0, %c0_0] : memref<16x128xbf16, #tpu.memory_space<vmem>>, vector<16x128xbf16>
    %c0_1 = arith.constant 0 : index
    %c0_2 = arith.constant 0 : index
    %1 = vector.load %arg2[%c0_1, %c0_2] : memref<128x128xbf16, #tpu.memory_space<vmem>>, vector<128x128xbf16>
    %cst = arith.constant dense<0.000000e+00> : vector<16x128xf32>
    %2 = tpu.matmul %0, %1, %cst {dimension_numbers = #tpu.dot_dimension_numbers<[1], [0], [0], [1], [0, 0, 1, 1], [], []>} : vector<16x128xbf16>, vector<128x128xbf16>, vector<16x128xf32> -> vector<16x128xf32>
    %c0_3 = arith.constant 0 : index
    %c0_4 = arith.constant 0 : index
    %3 = vector.load %arg3[%c0_3, %c0_4] : memref<1x128xf32, #tpu.memory_space<vmem>>, vector<1x128xf32>
    %4 = vector.broadcast %3 : vector<1x128xf32> to vector<16x128xf32>
    %5 = arith.addf %2, %4 : vector<16x128xf32>
    %cst_5 = arith.constant 0.000000e+00 : f32
    %6 = vector.broadcast %cst_5 : f32 to vector<16x128xf32>
    %7 = arith.cmpf oge, %5, %6 : vector<16x128xf32>
    %cst_6 = arith.constant 0.00999999977 : f32
    %8 = vector.broadcast %cst_6 : f32 to vector<16x128xf32>
    %9 = arith.mulf %8, %5 : vector<16x128xf32>
    %10 = arith.select %7, %5, %9 : vector<16x128xi1>, vector<16x128xf32>
    %11 = arith.truncf %10 : vector<16x128xf32> to vector<16x128xbf16>
    %c0_7 = arith.constant 0 : index
    %c0_8 = arith.constant 0 : index
    %12 = vector.load %arg4[%c0_7, %c0_8] : memref<128x128xbf16, #tpu.memory_space<vmem>>, vector<128x128xbf16>
    %cst_9 = arith.constant dense<0.000000e+00> : vector<16x128xf32>
    %13 = tpu.matmul %11, %12, %cst_9 {dimension_numbers = #tpu.dot_dimension_numbers<[1], [0], [0], [1], [0, 0, 1, 1], [], []>} : vector<16x128xbf16>, vector<128x128xbf16>, vector<16x128xf32> -> vector<16x128xf32>
    %c0_10 = arith.constant 0 : index
    %c0_11 = arith.constant 0 : index
    %14 = vector.load %arg5[%c0_10, %c0_11] : memref<1x128xf32, #tpu.memory_space<vmem>>, vector<1x128xf32>
    %15 = vector.broadcast %14 : vector<1x128xf32> to vector<16x128xf32>
    %16 = arith.addf %13, %15 : vector<16x128xf32>
    %cst_12 = arith.constant 0.000000e+00 : f32
    %17 = vector.broadcast %cst_12 : f32 to vector<16x128xf32>
    %18 = arith.cmpf oge, %16, %17 : vector<16x128xf32>
    %cst_13 = arith.constant 0.00999999977 : f32
    %19 = vector.broadcast %cst_13 : f32 to vector<16x128xf32>
    %20 = arith.mulf %19, %16 : vector<16x128xf32>
    %21 = arith.select %18, %16, %20 : vector<16x128xi1>, vector<16x128xf32>
    %22 = arith.truncf %21 : vector<16x128xf32> to vector<16x128xbf16>
    %c0_14 = arith.constant 0 : index
    %c0_15 = arith.constant 0 : index
    %23 = vector.load %arg6[%c0_14, %c0_15] : memref<128x128xbf16, #tpu.memory_space<vmem>>, vector<128x128xbf16>
    %cst_16 = arith.constant dense<0.000000e+00> : vector<16x128xf32>
    %24 = tpu.matmul %22, %23, %cst_16 {dimension_numbers = #tpu.dot_dimension_numbers<[1], [0], [0], [1], [0, 0, 1, 1], [], []>} : vector<16x128xbf16>, vector<128x128xbf16>, vector<16x128xf32> -> vector<16x128xf32>
    %c0_17 = arith.constant 0 : index
    %c0_18 = arith.constant 0 : index
    %25 = vector.load %arg7[%c0_17, %c0_18] : memref<1x128xf32, #tpu.memory_space<vmem>>, vector<1x128xf32>
    %26 = vector.broadcast %25 : vector<1x128xf32> to vector<16x128xf32>
    %27 = arith.addf %24, %26 : vector<16x128xf32>
    %cst_19 = arith.constant 0.000000e+00 : f32
    %28 = vector.broadcast %cst_19 : f32 to vector<16x128xf32>
    %29 = arith.cmpf oge, %27, %28 : vector<16x128xf32>
    %cst_20 = arith.constant 0.00999999977 : f32
    %30 = vector.broadcast %cst_20 : f32 to vector<16x128xf32>
    %31 = arith.mulf %30, %27 : vector<16x128xf32>
    %32 = arith.select %29, %27, %31 : vector<16x128xi1>, vector<16x128xf32>
    %33 = arith.truncf %32 : vector<16x128xf32> to vector<16x128xbf16>
    %c0_21 = arith.constant 0 : index
    %c0_22 = arith.constant 0 : index
    %34 = vector.load %arg8[%c0_21, %c0_22] : memref<128x128xbf16, #tpu.memory_space<vmem>>, vector<128x128xbf16>
    %cst_23 = arith.constant dense<0.000000e+00> : vector<16x128xf32>
    %35 = tpu.matmul %33, %34, %cst_23 {dimension_numbers = #tpu.dot_dimension_numbers<[1], [0], [0], [1], [0, 0, 1, 1], [], []>} : vector<16x128xbf16>, vector<128x128xbf16>, vector<16x128xf32> -> vector<16x128xf32>
    %c0_24 = arith.constant 0 : index
    %c0_25 = arith.constant 0 : index
    %36 = vector.load %arg9[%c0_24, %c0_25] : memref<1x128xf32, #tpu.memory_space<vmem>>, vector<1x128xf32>
    %37 = vector.broadcast %36 : vector<1x128xf32> to vector<16x128xf32>
    %38 = arith.addf %35, %37 : vector<16x128xf32>
    %c0_26 = arith.constant 0 : index
    %c0_27 = arith.constant 0 : index
    %39 = vector.load %arg10[%c0_26, %c0_27] : memref<16x128xf32, #tpu.memory_space<vmem>>, vector<16x128xf32>
    tpu.vector_store %arg10[%c0_26, %c0_27], %38 {strides = array<i32>} : memref<16x128xf32, #tpu.memory_space<vmem>>, vector<16x128xf32>,
    return
  }
  func.func @transform_0(%arg0: i32) -> (i32, i32) {
    %c0_i32 = arith.constant 0 : i32
    %c0_i32_0 = arith.constant 0 : i32
    return %arg0, %c0_i32 : i32, i32
  }
  func.func @transform_1(%arg0: i32) -> (i32, i32) {
    %c0_i32 = arith.constant 0 : i32
    %c0_i32_0 = arith.constant 0 : i32
    %c0_i32_1 = arith.constant 0 : i32
    return %c0_i32, %c0_i32_0 : i32, i32
  }
  func.func @transform_2(%arg0: i32) -> (i32, i32) {
    %c0_i32 = arith.constant 0 : i32
    %c0_i32_0 = arith.constant 0 : i32
    %c0_i32_1 = arith.constant 0 : i32
    return %c0_i32, %c0_i32_0 : i32, i32
  }
  func.func @transform_3(%arg0: i32) -> (i32, i32) {
    %c0_i32 = arith.constant 0 : i32
    %c0_i32_0 = arith.constant 0 : i32
    %c0_i32_1 = arith.constant 0 : i32
    return %c0_i32, %c0_i32_0 : i32, i32
  }
  func.func @transform_4(%arg0: i32) -> (i32, i32) {
    %c0_i32 = arith.constant 0 : i32
    %c0_i32_0 = arith.constant 0 : i32
    %c0_i32_1 = arith.constant 0 : i32
    return %c0_i32, %c0_i32_0 : i32, i32
  }
  func.func @transform_5(%arg0: i32) -> (i32, i32) {
    %c0_i32 = arith.constant 0 : i32
    %c0_i32_0 = arith.constant 0 : i32
    %c0_i32_1 = arith.constant 0 : i32
    return %c0_i32, %c0_i32_0 : i32, i32
  }
  func.func @transform_6(%arg0: i32) -> (i32, i32) {
    %c0_i32 = arith.constant 0 : i32
    %c0_i32_0 = arith.constant 0 : i32
    %c0_i32_1 = arith.constant 0 : i32
    return %c0_i32, %c0_i32_0 : i32, i32
  }
  func.func @transform_7(%arg0: i32) -> (i32, i32) {
    %c0_i32 = arith.constant 0 : i32
    %c0_i32_0 = arith.constant 0 : i32
    %c0_i32_1 = arith.constant 0 : i32
    return %c0_i32, %c0_i32_0 : i32, i32
  }
  func.func @transform_8(%arg0: i32) -> (i32, i32) {
    %c0_i32 = arith.constant 0 : i32
    %c0_i32_0 = arith.constant 0 : i32
    %c0_i32_1 = arith.constant 0 : i32
    return %c0_i32, %c0_i32_0 : i32, i32
  }
  func.func @transform_9(%arg0: i32) -> (i32, i32) {
    %c0_i32 = arith.constant 0 : i32
    %c0_i32_0 = arith.constant 0 : i32
    return %arg0, %c0_i32 : i32, i32
  }
}

</mosaic_0001>

<llo_original>
// kernel: tpu_custom_call.1
$region0: #{tpu_custom_call.1}
  #allocation0 [shape = 'u32[]', space=smem, size = 0x4, offset = 0x4, fixed_abs, tag = 'smem constant byte address 0x4 - core index']
  #allocation1 [shape = 'u32[144,128]{1,0:T(1,128)}', space=vmem, size = 0x12000, scoped, tag = 'internal scratch']
  %s0 = inlined_call_operand.hbm [shape: bf16[16,128], index: 0, kind: input, shape index: {}]
  %s1 = inlined_call_operand.hbm [shape: bf16[128,128], index: 1, kind: input, shape index: {}]
  %s2 = inlined_call_operand.vmem [shape: f32[1,128], index: 2, kind: input, shape index: {}]
  %s3 = inlined_call_operand.hbm [shape: bf16[128,128], index: 3, kind: input, shape index: {}]
  %s4 = inlined_call_operand.vmem [shape: f32[1,128], index: 4, kind: input, shape index: {}]
  %s5 = inlined_call_operand.hbm [shape: bf16[128,128], index: 5, kind: input, shape index: {}]
  %s6 = inlined_call_operand.vmem [shape: f32[1,128], index: 6, kind: input, shape index: {}]
  %s7 = inlined_call_operand.hbm [shape: bf16[128,128], index: 7, kind: input, shape index: {}]
  %s8 = inlined_call_operand.vmem [shape: f32[1,128], index: 8, kind: input, shape index: {}]
  %s9 = inlined_call_operand.hbm [shape: f32[16,128], index: 9, kind: output, shape index: {}]
  %s10 = sld [smem:[#allocation0]]
  $region66: #{tpu_custom_call.1} parent=0
    _
  %s12 = ssub.s32 1, %s10
  %s13 = scalar_select 0, %s12, %s10
  $region1: #{tpu_custom_call.1} parent=0
    #allocation2 [shape = 'u8[4096]{0}', space=vmem, size = 0x1000, scoped, tag = 'input window, operand 0, single buffered']
    #allocation3 [shape = 's32[1]{0}', space=sflag, size = 0x4, scoped, tag = 'scoped memory for tpu_custom_call.1']
    #allocation4 [shape = 's32[1]{0}', space=sflag, size = 0x4, scoped, tag = 'scoped memory for tpu_custom_call.1']
    #allocation5 [shape = 'u8[32768]{0}', space=vmem, size = 0x8000, scoped, tag = 'input window, operand 1, single buffered']
    #allocation6 [shape = 's32[1]{0}', space=sflag, size = 0x4, scoped, tag = 'scoped memory for tpu_custom_call.1']
    #allocation7 [shape = 'u8[32768]{0}', space=vmem, size = 0x8000, scoped, tag = 'input window, operand 3, single buffered']
    #allocation8 [shape = 'u8[32768]{0}', space=vmem, size = 0x8000, scoped, tag = 'input window, operand 5, single buffered']
    #allocation9 [shape = 's32[1]{0}', space=sflag, size = 0x4, scoped, tag = 'scoped memory for tpu_custom_call.1']
    #allocation10 [shape = 'u8[32768]{0}', space=vmem, size = 0x8000, scoped, tag = 'input window, operand 7, single buffered']
    #allocation11 [shape = 'u8[8192]{0}', space=vmem, size = 0x2000, scoped, tag = 'output window, operand 0, single buffered']
    %14 = vsyncpa [#allocation3], 0
    %15 = vsyncpa [#allocation6], 0
    %16 = vsyncpa [#allocation9], 0
    %17 = vsyncpa [#allocation4], 0
    // Predicated region
    $region2: #{tpu_custom_call.1} parent=1 // pred_check
      _
    $region3: #{tpu_custom_call.1} parent=1 // pred_check_branch
      %19 = sbr.rel (0) target = $region5
    $region4: #{tpu_custom_call.1} parent=1 // pred_region
      %s21 = ssub.s32 128, 128
      %22 = vsyncadd [#allocation3], %s21
      %s23 = sshll.u32 [#allocation2], 4
      %s24 = int_to_ptr.vmem [resolvable:$true] %s23
      %29 = dma.hbm_to_vmem [thread:$0]  %s0, 128, %s24, [#allocation3], 64, 64, 4
    $region5: #{tpu_custom_call.1} parent=1 // pred_fallthru
      _
    // Predicated region
    $region6: #{tpu_custom_call.1} parent=1 // pred_check
      _
    $region7: #{tpu_custom_call.1} parent=1 // pred_check_branch
      %31 = sbr.rel (0) target = $region9
    $region8: #{tpu_custom_call.1} parent=1 // pred_region
      %s33 = ssub.s32 1024, 1024
      %34 = vsyncadd [#allocation6], %s33
      %s35 = sshll.u32 [#allocation5], 4
      %s36 = int_to_ptr.vmem [resolvable:$true] %s35
      %41 = dma.hbm_to_vmem [thread:$0]  %s1, 1024, %s36, [#allocation6], 64, 64, 4
    $region9: #{tpu_custom_call.1} parent=1 // pred_fallthru
      _
    // Predicated region
    $region10: #{tpu_custom_call.1} parent=1 // pred_check
      _
    $region11: #{tpu_custom_call.1} parent=1 // pred_check_branch
      %43 = sbr.rel (0) target = $region13
    $region12: #{tpu_custom_call.1} parent=1 // pred_region
      _
    $region13: #{tpu_custom_call.1} parent=1 // pred_fallthru
      _
    // Predicated region
    $region14: #{tpu_custom_call.1} parent=1 // pred_check
      _
    $region15: #{tpu_custom_call.1} parent=1 // pred_check_branch
      %45 = sbr.rel (0) target = $region17
    $region16: #{tpu_custom_call.1} parent=1 // pred_region
      %s47 = ssub.s32 1024, 1024
      %48 = vsyncadd [#allocation6], %s47
      %s49 = sshll.u32 [#allocation7], 4
      %s50 = int_to_ptr.vmem [resolvable:$true] %s49
      %55 = dma.hbm_to_vmem [thread:$0]  %s3, 1024, %s50, [#allocation6], 64, 64, 4
    $region17: #{tpu_custom_call.1} parent=1 // pred_fallthru
      _
    // Predicated region
    $region18: #{tpu_custom_call.1} parent=1 // pred_check
      _
    $region19: #{tpu_custom_call.1} parent=1 // pred_check_branch
      %57 = sbr.rel (0) target = $region21
    $region20: #{tpu_custom_call.1} parent=1 // pred_region
      _
    $region21: #{tpu_custom_call.1} parent=1 // pred_fallthru
      _
    // Predicated region
    $region22: #{tpu_custom_call.1} parent=1 // pred_check
      _
    $region23: #{tpu_custom_call.1} parent=1 // pred_check_branch
      %59 = sbr.rel (0) target = $region25
    $region24: #{tpu_custom_call.1} parent=1 // pred_region
      %s61 = ssub.s32 1024, 1024
      %62 = vsyncadd [#allocation9], %s61
      %s63 = sshll.u32 [#allocation8], 4
      %s64 = int_to_ptr.vmem [resolvable:$true] %s63
      %69 = dma.hbm_to_vmem [thread:$0]  %s5, 1024, %s64, [#allocation9], 64, 64, 4
    $region25: #{tpu_custom_call.1} parent=1 // pred_fallthru
      _
    // Predicated region
    $region26: #{tpu_custom_call.1} parent=1 // pred_check
      _
    $region27: #{tpu_custom_call.1} parent=1 // pred_check_branch
      %71 = sbr.rel (0) target = $region29
    $region28: #{tpu_custom_call.1} parent=1 // pred_region
      _
    $region29: #{tpu_custom_call.1} parent=1 // pred_fallthru
      _
    // Predicated region
    $region30: #{tpu_custom_call.1} parent=1 // pred_check
      _
    $region31: #{tpu_custom_call.1} parent=1 // pred_check_branch
      %73 = sbr.rel (0) target = $region33
    $region32: #{tpu_custom_call.1} parent=1 // pred_region
      %s75 = ssub.s32 1024, 1024
      %76 = vsyncadd [#allocation9], %s75
      %s77 = sshll.u32 [#allocation10], 4
      %s78 = int_to_ptr.vmem [resolvable:$true] %s77
      %83 = dma.hbm_to_vmem [thread:$0]  %s7, 1024, %s78, [#allocation9], 64, 64, 4
    $region33: #{tpu_custom_call.1} parent=1 // pred_fallthru
      _
    // Predicated region
    $region34: #{tpu_custom_call.1} parent=1 // pred_check
      _
    $region35: #{tpu_custom_call.1} parent=1 // pred_check_branch
      %85 = sbr.rel (0) target = $region37
    $region36: #{tpu_custom_call.1} parent=1 // pred_region
      _
    $region37: #{tpu_custom_call.1} parent=1 // pred_fallthru
      _
    // Predicated region
    $region38: #{tpu_custom_call.1} parent=1 // pred_check
      _
    $region39: #{tpu_custom_call.1} parent=1 // pred_check_branch
      %87 = sbr.rel (0) target = $region41
    $region40: #{tpu_custom_call.1} parent=1 // pred_region
      %88 = dma.done [#allocation3], 128
    $region41: #{tpu_custom_call.1} parent=1 // pred_fallthru
      _
    // Predicated region
    $region42: #{tpu_custom_call.1} parent=1 // pred_check
      _
    $region43: #{tpu_custom_call.1} parent=1 // pred_check_branch
      %90 = sbr.rel (0) target = $region45
    $region44: #{tpu_custom_call.1} parent=1 // pred_region
      %91 = dma.done [#allocation6], 1024
    $region45: #{tpu_custom_call.1} parent=1 // pred_fallthru
      _
    // Predicated region
    $region46: #{tpu_custom_call.1} parent=1 // pred_check
      _
    $region47: #{tpu_custom_call.1} parent=1 // pred_check_branch
      %93 = sbr.rel (0) target = $region49
    $region48: #{tpu_custom_call.1} parent=1 // pred_region
      %94 = dma.done [#allocation6], 1024
    $region49: #{tpu_custom_call.1} parent=1 // pred_fallthru
      _
    // Predicated region
    $region50: #{tpu_custom_call.1} parent=1 // pred_check
      _
    $region51: #{tpu_custom_call.1} parent=1 // pred_check_branch
      %96 = sbr.rel (0) target = $region53
    $region52: #{tpu_custom_call.1} parent=1 // pred_region
      %97 = dma.done [#allocation9], 1024
    $region53: #{tpu_custom_call.1} parent=1 // pred_fallthru
      _
    // Predicated region
    $region54: #{tpu_custom_call.1} parent=1 // pred_check
      _
    $region55: #{tpu_custom_call.1} parent=1 // pred_check_branch
      %99 = sbr.rel (0) target = $region57
    $region56: #{tpu_custom_call.1} parent=1 // pred_region
      %100 = dma.done [#allocation9], 1024
    $region57: #{tpu_custom_call.1} parent=1 // pred_fallthru
      _
    %v102 = vld [vmem:[#allocation2] sm:$0xf]
    %v103 = vld [vmem:[#allocation2 + $0x4] sm:$0xf]
    %v104 = vld [vmem:[#allocation5] sm:$0xf]
    %v105 = vld [vmem:[#allocation5 + $0x4] sm:$0xf]
    %v106 = vld [vmem:[#allocation5 + $0x8] sm:$0xf]
    %v107 = vld [vmem:[#allocation5 + $0xc] sm:$0xf]
    %v108 = vld [vmem:[#allocation5 + $0x10] sm:$0xf]
    %v109 = vld [vmem:[#allocation5 + $0x14] sm:$0xf]
    %v110 = vld [vmem:[#allocation5 + $0x18] sm:$0xf]
    %v111 = vld [vmem:[#allocation5 + $0x1c] sm:$0xf]
    %v112 = vld [vmem:[#allocation5 + $0x20] sm:$0xf]
    %v113 = vld [vmem:[#allocation5 + $0x24] sm:$0xf]
    %v114 = vld [vmem:[#allocation5 + $0x28] sm:$0xf]
    %v115 = vld [vmem:[#allocation5 + $0x2c] sm:$0xf]
    %v116 = vld [vmem:[#allocation5 + $0x30] sm:$0xf]
    %v117 = vld [vmem:[#allocation5 + $0x34] sm:$0xf]
    %v118 = vld [vmem:[#allocation5 + $0x38] sm:$0xf]
    %v119 = vld [vmem:[#allocation5 + $0x3c] sm:$0xf]
    %v120 = vld [vmem:[%s2] sm:$0x1]
    %v122 = vlaneseq
    %v123 = vshrl.u32 %v122, 7
    %v124 = vsub.s32 0, %v123
    %v125 = vrot.slane %v120, %v124
    %v129 = vunpack.c.l.b16 %v102
    %v130 = vunpack.c.l.b16 %v103
    %v131 = vpack.c.b16 %v130, %v129
    %v149 = vunpack.c.l.b16 %v104
    %v150 = vunpack.c.l.b16 %v105
    %v151 = vunpack.c.l.b16 %v106
    %v152 = vunpack.c.l.b16 %v107
    %v153 = vunpack.c.l.b16 %v108
    %v154 = vunpack.c.l.b16 %v109
    %v155 = vunpack.c.l.b16 %v110
    %v156 = vunpack.c.l.b16 %v111
    %v157 = vunpack.c.l.b16 %v112
    %v158 = vunpack.c.l.b16 %v113
    %v159 = vunpack.c.l.b16 %v114
    %v160 = vunpack.c.l.b16 %v115
    %v161 = vunpack.c.l.b16 %v116
    %v162 = vunpack.c.l.b16 %v117
    %v163 = vunpack.c.l.b16 %v118
    %v164 = vunpack.c.l.b16 %v119
    %v165 = vpack.c.b16 %v150, %v149
    %v166 = vpack.c.b16 %v152, %v151
    %v167 = vpack.c.b16 %v154, %v153
    %v168 = vpack.c.b16 %v156, %v155
    %v169 = vpack.c.b16 %v158, %v157
    %v170 = vpack.c.b16 %v160, %v159
    %v171 = vpack.c.b16 %v162, %v161
    %v172 = vpack.c.b16 %v164, %v163
    %181 = vmatprep.subr.bf16.mxu0 0
    %182 = vmatpush1.bf16.msra.mxu0 %v165
    %183 = vmatprep.subr.bf16.mxu0 0
    %184 = vmatpush1.bf16.msra.mxu0 %v166
    %185 = vmatprep.subr.bf16.mxu0 0
    %186 = vmatpush1.bf16.msra.mxu0 %v167
    %187 = vmatprep.subr.bf16.mxu0 0
    %188 = vmatpush1.bf16.msra.mxu0 %v168
    %189 = vmatprep.subr.bf16.mxu0 0
    %190 = vmatpush1.bf16.msra.mxu0 %v169
    %191 = vmatprep.subr.bf16.mxu0 0
    %192 = vmatpush1.bf16.msra.mxu0 %v170
    %193 = vmatprep.subr.bf16.mxu0 0
    %194 = vmatpush1.bf16.msra.mxu0 %v171
    %195 = vmatprep.subr.bf16.mxu0 0
    %196 = vmatpush1.bf16.msra.mxu0 %v172
    %197 = vmatprep.subr.bf16.mxu0 0
    %198 = vmatpush1.bf16.msra.mxu0 0
    %199 = vmatprep.subr.bf16.mxu0 0
    %200 = vmatpush1.bf16.msra.mxu0 0
    %201 = vmatprep.subr.bf16.mxu0 0
    %202 = vmatpush1.bf16.msra.mxu0 0
    %203 = vmatprep.subr.bf16.mxu0 0
    %204 = vmatpush1.bf16.msra.mxu0 0
    %205 = vmatprep.subr.bf16.mxu0 0
    %206 = vmatpush1.bf16.msra.mxu0 0
    %207 = vmatprep.subr.bf16.mxu0 0
    %208 = vmatpush1.bf16.msra.mxu0 0
    %209 = vmatprep.subr.bf16.mxu0 0
    %210 = vmatpush1.bf16.msra.mxu0 0
    %211 = vmatprep.subr.bf16.mxu0 0
    %212 = vmatpush1.bf16.msra.mxu0 0
    %213 = vmatprep.mubr.bf16.mxu0 0
    %214 = vmatmul.mubr.bf16.gmra.mrb[0].mxu0 %v131
    %v215 = vpop.f32.mrb[0].mxu0
    %v216 = vadd.f32 %v125, %v215
    %v217 = vpop.f32.mrb[0].mxu0
    %v218 = vpop.f32.mrb[0].mxu0
    %v219 = vadd.f32 %v125, %v218
    %v220 = vpop.f32.mrb[0].mxu0
    %221 = vdwg.mxu0
    %vm222 = vcmp.ge.f32.partialorder %v216, 0.0
    %vm223 = vcmp.ge.f32.partialorder %v219, 0.0
    %v224 = vmul.f32 %v216, 0.01
    %v225 = vmul.f32 %v219, 0.01
    %v226 = vsel %vm222, %v216, %v224
    %v227 = vsel %vm223, %v219, %v225
    %v228 = vpack.c.bf16 %v227, %v226
    %v229 = vld [vmem:[#allocation7] sm:$0xf]
    %v230 = vld [vmem:[#allocation7 + $0x4] sm:$0xf]
    %v231 = vld [vmem:[#allocation7 + $0x8] sm:$0xf]
    %v232 = vld [vmem:[#allocation7 + $0xc] sm:$0xf]
    %v233 = vld [vmem:[#allocation7 + $0x10] sm:$0xf]
    %v234 = vld [vmem:[#allocation7 + $0x14] sm:$0xf]
    %v235 = vld [vmem:[#allocation7 + $0x18] sm:$0xf]
    %v236 = vld [vmem:[#allocation7 + $0x1c] sm:$0xf]
    %v237 = vld [vmem:[#allocation7 + $0x20] sm:$0xf]
    %v238 = vld [vmem:[#allocation7 + $0x24] sm:$0xf]
    %v239 = vld [vmem:[#allocation7 + $0x28] sm:$0xf]
    %v240 = vld [vmem:[#allocation7 + $0x2c] sm:$0xf]
    %v241 = vld [vmem:[#allocation7 + $0x30] sm:$0xf]
    %v242 = vld [vmem:[#allocation7 + $0x34] sm:$0xf]
    %v243 = vld [vmem:[#allocation7 + $0x38] sm:$0xf]
    %v244 = vld [vmem:[#allocation7 + $0x3c] sm:$0xf]
    %v245 = vld [vmem:[%s4] sm:$0x1]
    %v247 = vlaneseq
    %v248 = vshrl.u32 %v247, 7
    %v249 = vsub.s32 0, %v248
    %v250 = vrot.slane %v245, %v249
    %v268 = vunpack.c.l.b16 %v229
    %v269 = vunpack.c.l.b16 %v230
    %v270 = vunpack.c.l.b16 %v231
    %v271 = vunpack.c.l.b16 %v232
    %v272 = vunpack.c.l.b16 %v233
    %v273 = vunpack.c.l.b16 %v234
    %v274 = vunpack.c.l.b16 %v235
    %v275 = vunpack.c.l.b16 %v236
    %v276 = vunpack.c.l.b16 %v237
    %v277 = vunpack.c.l.b16 %v238
    %v278 = vunpack.c.l.b16 %v239
    %v279 = vunpack.c.l.b16 %v240
    %v280 = vunpack.c.l.b16 %v241
    %v281 = vunpack.c.l.b16 %v242
    %v282 = vunpack.c.l.b16 %v243
    %v283 = vunpack.c.l.b16 %v244
    %v284 = vpack.c.b16 %v269, %v268
    %v285 = vpack.c.b16 %v271, %v270
    %v286 = vpack.c.b16 %v273, %v272
    %v287 = vpack.c.b16 %v275, %v274
    %v288 = vpack.c.b16 %v277, %v276
    %v289 = vpack.c.b16 %v279, %v278
    %v290 = vpack.c.b16 %v281, %v280
    %v291 = vpack.c.b16 %v283, %v282
    %300 = vmatprep.subr.bf16.mxu0 0
    %301 = vmatpush1.bf16.msra.mxu0 %v284
    %302 = vmatprep.subr.bf16.mxu0 0
    %303 = vmatpush1.bf16.msra.mxu0 %v285
    %304 = vmatprep.subr.bf16.mxu0 0
    %305 = vmatpush1.bf16.msra.mxu0 %v286
    %306 = vmatprep.subr.bf16.mxu0 0
    %307 = vmatpush1.bf16.msra.mxu0 %v287
    %308 = vmatprep.subr.bf16.mxu0 0
    %309 = vmatpush1.bf16.msra.mxu0 %v288
    %310 = vmatprep.subr.bf16.mxu0 0
    %311 = vmatpush1.bf16.msra.mxu0 %v289
    %312 = vmatprep.subr.bf16.mxu0 0
    %313 = vmatpush1.bf16.msra.mxu0 %v290
    %314 = vmatprep.subr.bf16.mxu0 0
    %315 = vmatpush1.bf16.msra.mxu0 %v291
    %316 = vmatprep.subr.bf16.mxu0 0
    %317 = vmatpush1.bf16.msra.mxu0 0
    %318 = vmatprep.subr.bf16.mxu0 0
    %319 = vmatpush1.bf16.msra.mxu0 0
    %320 = vmatprep.subr.bf16.mxu0 0
    %321 = vmatpush1.bf16.msra.mxu0 0
    %322 = vmatprep.subr.bf16.mxu0 0
    %323 = vmatpush1.bf16.msra.mxu0 0
    %324 = vmatprep.subr.bf16.mxu0 0
    %325 = vmatpush1.bf16.msra.mxu0 0
    %326 = vmatprep.subr.bf16.mxu0 0
    %327 = vmatpush1.bf16.msra.mxu0 0
    %328 = vmatprep.subr.bf16.mxu0 0
    %329 = vmatpush1.bf16.msra.mxu0 0
    %330 = vmatprep.subr.bf16.mxu0 0
    %331 = vmatpush1.bf16.msra.mxu0 0
    %332 = vmatprep.mubr.bf16.mxu0 0
    %333 = vmatmul.mubr.bf16.gmra.mrb[0].mxu0 %v228
    %v334 = vpop.f32.mrb[0].mxu0
    %v335 = vadd.f32 %v250, %v334
    %v336 = vpop.f32.mrb[0].mxu0
    %v337 = vpop.f32.mrb[0].mxu0
    %v338 = vadd.f32 %v250, %v337
    %v339 = vpop.f32.mrb[0].mxu0
    %340 = vdwg.mxu0
    %vm341 = vcmp.ge.f32.partialorder %v335, 0.0
    %vm342 = vcmp.ge.f32.partialorder %v338, 0.0
    %v343 = vmul.f32 %v335, 0.01
    %v344 = vmul.f32 %v338, 0.01
    %v345 = vsel %vm341, %v335, %v343
    %v346 = vsel %vm342, %v338, %v344
    %v347 = vpack.c.bf16 %v346, %v345
    %v348 = vld [vmem:[#allocation8] sm:$0xf]
    %v349 = vld [vmem:[#allocation8 + $0x4] sm:$0xf]
    %v350 = vld [vmem:[#allocation8 + $0x8] sm:$0xf]
    %v351 = vld [vmem:[#allocation8 + $0xc] sm:$0xf]
    %v352 = vld [vmem:[#allocation8 + $0x10] sm:$0xf]
    %v353 = vld [vmem:[#allocation8 + $0x14] sm:$0xf]
    %v354 = vld [vmem:[#allocation8 + $0x18] sm:$0xf]
    %v355 = vld [vmem:[#allocation8 + $0x1c] sm:$0xf]
    %v356 = vld [vmem:[#allocation8 + $0x20] sm:$0xf]
    %v357 = vld [vmem:[#allocation8 + $0x24] sm:$0xf]
    %v358 = vld [vmem:[#allocation8 + $0x28] sm:$0xf]
    %v359 = vld [vmem:[#allocation8 + $0x2c] sm:$0xf]
    %v360 = vld [vmem:[#allocation8 + $0x30] sm:$0xf]
    %v361 = vld [vmem:[#allocation8 + $0x34] sm:$0xf]
    %v362 = vld [vmem:[#allocation8 + $0x38] sm:$0xf]
    %v363 = vld [vmem:[#allocation8 + $0x3c] sm:$0xf]
    %v364 = vld [vmem:[%s6] sm:$0x1]
    %v366 = vlaneseq
    %v367 = vshrl.u32 %v366, 7
    %v368 = vsub.s32 0, %v367
    %v369 = vrot.slane %v364, %v368
    %v387 = vunpack.c.l.b16 %v348
    %v388 = vunpack.c.l.b16 %v349
    %v389 = vunpack.c.l.b16 %v350
    %v390 = vunpack.c.l.b16 %v351
    %v391 = vunpack.c.l.b16 %v352
    %v392 = vunpack.c.l.b16 %v353
    %v393 = vunpack.c.l.b16 %v354
    %v394 = vunpack.c.l.b16 %v355
    %v395 = vunpack.c.l.b16 %v356
    %v396 = vunpack.c.l.b16 %v357
    %v397 = vunpack.c.l.b16 %v358
    %v398 = vunpack.c.l.b16 %v359
    %v399 = vunpack.c.l.b16 %v360
    %v400 = vunpack.c.l.b16 %v361
    %v401 = vunpack.c.l.b16 %v362
    %v402 = vunpack.c.l.b16 %v363
    %v403 = vpack.c.b16 %v388, %v387
    %v404 = vpack.c.b16 %v390, %v389
    %v405 = vpack.c.b16 %v392, %v391
    %v406 = vpack.c.b16 %v394, %v393
    %v407 = vpack.c.b16 %v396, %v395
    %v408 = vpack.c.b16 %v398, %v397
    %v409 = vpack.c.b16 %v400, %v399
    %v410 = vpack.c.b16 %v402, %v401
    %419 = vmatprep.subr.bf16.mxu0 0
    %420 = vmatpush1.bf16.msra.mxu0 %v403
    %421 = vmatprep.subr.bf16.mxu0 0
    %422 = vmatpush1.bf16.msra.mxu0 %v404
    %423 = vmatprep.subr.bf16.mxu0 0
    %424 = vmatpush1.bf16.msra.mxu0 %v405
    %425 = vmatprep.subr.bf16.mxu0 0
    %426 = vmatpush1.bf16.msra.mxu0 %v406
    %427 = vmatprep.subr.bf16.mxu0 0
    %428 = vmatpush1.bf16.msra.mxu0 %v407
    %429 = vmatprep.subr.bf16.mxu0 0
    %430 = vmatpush1.bf16.msra.mxu0 %v408
    %431 = vmatprep.subr.bf16.mxu0 0
    %432 = vmatpush1.bf16.msra.mxu0 %v409
    %433 = vmatprep.subr.bf16.mxu0 0
    %434 = vmatpush1.bf16.msra.mxu0 %v410
    %435 = vmatprep.subr.bf16.mxu0 0
    %436 = vmatpush1.bf16.msra.mxu0 0
    %437 = vmatprep.subr.bf16.mxu0 0
    %438 = vmatpush1.bf16.msra.mxu0 0
    %439 = vmatprep.subr.bf16.mxu0 0
    %440 = vmatpush1.bf16.msra.mxu0 0
    %441 = vmatprep.subr.bf16.mxu0 0
    %442 = vmatpush1.bf16.msra.mxu0 0
    %443 = vmatprep.subr.bf16.mxu0 0
    %444 = vmatpush1.bf16.msra.mxu0 0
    %445 = vmatprep.subr.bf16.mxu0 0
    %446 = vmatpush1.bf16.msra.mxu0 0
    %447 = vmatprep.subr.bf16.mxu0 0
    %448 = vmatpush1.bf16.msra.mxu0 0
    %449 = vmatprep.subr.bf16.mxu0 0
    %450 = vmatpush1.bf16.msra.mxu0 0
    %451 = vmatprep.mubr.bf16.mxu0 0
    %452 = vmatmul.mubr.bf16.gmra.mrb[0].mxu0 %v347
    %v453 = vpop.f32.mrb[0].mxu0
    %v454 = vadd.f32 %v369, %v453
    %v455 = vpop.f32.mrb[0].mxu0
    %v456 = vpop.f32.mrb[0].mxu0
    %v457 = vadd.f32 %v369, %v456
    %v458 = vpop.f32.mrb[0].mxu0
    %459 = vdwg.mxu0
    %vm460 = vcmp.ge.f32.partialorder %v454, 0.0
    %vm461 = vcmp.ge.f32.partialorder %v457, 0.0
    %v462 = vmul.f32 %v454, 0.01
    %v463 = vmul.f32 %v457, 0.01
    %v464 = vsel %vm460, %v454, %v462
    %v465 = vsel %vm461, %v457, %v463
    %v466 = vpack.c.bf16 %v465, %v464
    %v467 = vld [vmem:[#allocation10] sm:$0xf]
    %v468 = vld [vmem:[#allocation10 + $0x4] sm:$0xf]
    %v469 = vld [vmem:[#allocation10 + $0x8] sm:$0xf]
    %v470 = vld [vmem:[#allocation10 + $0xc] sm:$0xf]
    %v471 = vld [vmem:[#allocation10 + $0x10] sm:$0xf]
    %v472 = vld [vmem:[#allocation10 + $0x14] sm:$0xf]
    %v473 = vld [vmem:[#allocation10 + $0x18] sm:$0xf]
    %v474 = vld [vmem:[#allocation10 + $0x1c] sm:$0xf]
    %v475 = vld [vmem:[#allocation10 + $0x20] sm:$0xf]
    %v476 = vld [vmem:[#allocation10 + $0x24] sm:$0xf]
    %v477 = vld [vmem:[#allocation10 + $0x28] sm:$0xf]
    %v478 = vld [vmem:[#allocation10 + $0x2c] sm:$0xf]
    %v479 = vld [vmem:[#allocation10 + $0x30] sm:$0xf]
    %v480 = vld [vmem:[#allocation10 + $0x34] sm:$0xf]
    %v481 = vld [vmem:[#allocation10 + $0x38] sm:$0xf]
    %v482 = vld [vmem:[#allocation10 + $0x3c] sm:$0xf]
    %v483 = vld [vmem:[%s8] sm:$0x1]
    %v485 = vlaneseq
    %v486 = vshrl.u32 %v485, 7
    %v487 = vsub.s32 0, %v486
    %v488 = vrot.slane %v483, %v487
    %v506 = vunpack.c.l.b16 %v467
    %v507 = vunpack.c.l.b16 %v468
    %v508 = vunpack.c.l.b16 %v469
    %v509 = vunpack.c.l.b16 %v470
    %v510 = vunpack.c.l.b16 %v471
    %v511 = vunpack.c.l.b16 %v472
    %v512 = vunpack.c.l.b16 %v473
    %v513 = vunpack.c.l.b16 %v474
    %v514 = vunpack.c.l.b16 %v475
    %v515 = vunpack.c.l.b16 %v476
    %v516 = vunpack.c.l.b16 %v477
    %v517 = vunpack.c.l.b16 %v478
    %v518 = vunpack.c.l.b16 %v479
    %v519 = vunpack.c.l.b16 %v480
    %v520 = vunpack.c.l.b16 %v481
    %v521 = vunpack.c.l.b16 %v482
    %v522 = vpack.c.b16 %v507, %v506
    %v523 = vpack.c.b16 %v509, %v508
    %v524 = vpack.c.b16 %v511, %v510
    %v525 = vpack.c.b16 %v513, %v512
    %v526 = vpack.c.b16 %v515, %v514
    %v527 = vpack.c.b16 %v517, %v516
    %v528 = vpack.c.b16 %v519, %v518
    %v529 = vpack.c.b16 %v521, %v520
    %538 = vmatprep.subr.bf16.mxu0 0
    %539 = vmatpush1.bf16.msra.mxu0 %v522
    %540 = vmatprep.subr.bf16.mxu0 0
    %541 = vmatpush1.bf16.msra.mxu0 %v523
    %542 = vmatprep.subr.bf16.mxu0 0
    %543 = vmatpush1.bf16.msra.mxu0 %v524
    %544 = vmatprep.subr.bf16.mxu0 0
    %545 = vmatpush1.bf16.msra.mxu0 %v525
    %546 = vmatprep.subr.bf16.mxu0 0
    %547 = vmatpush1.bf16.msra.mxu0 %v526
    %548 = vmatprep.subr.bf16.mxu0 0
    %549 = vmatpush1.bf16.msra.mxu0 %v527
    %550 = vmatprep.subr.bf16.mxu0 0
    %551 = vmatpush1.bf16.msra.mxu0 %v528
    %552 = vmatprep.subr.bf16.mxu0 0
    %553 = vmatpush1.bf16.msra.mxu0 %v529
    %554 = vmatprep.subr.bf16.mxu0 0
    %555 = vmatpush1.bf16.msra.mxu0 0
    %556 = vmatprep.subr.bf16.mxu0 0
    %557 = vmatpush1.bf16.msra.mxu0 0
    %558 = vmatprep.subr.bf16.mxu0 0
    %559 = vmatpush1.bf16.msra.mxu0 0
    %560 = vmatprep.subr.bf16.mxu0 0
    %561 = vmatpush1.bf16.msra.mxu0 0
    %562 = vmatprep.subr.bf16.mxu0 0
    %563 = vmatpush1.bf16.msra.mxu0 0
    %564 = vmatprep.subr.bf16.mxu0 0
    %565 = vmatpush1.bf16.msra.mxu0 0
    %566 = vmatprep.subr.bf16.mxu0 0
    %567 = vmatpush1.bf16.msra.mxu0 0
    %568 = vmatprep.subr.bf16.mxu0 0
    %569 = vmatpush1.bf16.msra.mxu0 0
    %570 = vmatprep.mubr.bf16.mxu0 0
    %571 = vmatmul.mubr.bf16.gmra.mrb[0].mxu0 %v466
    %v572 = vpop.f32.mrb[0].mxu0
    %v573 = vadd.f32 %v488, %v572
    %v574 = vpop.f32.mrb[0].mxu0
    %v575 = vpop.f32.mrb[0].mxu0
    %v576 = vadd.f32 %v488, %v575
    %v577 = vpop.f32.mrb[0].mxu0
    %578 = vdwg.mxu0
    %579 = vst [vmem:[#allocation11] sm:$0xff] %v573
    %580 = vst [vmem:[#allocation11 + $0x8] sm:$0xff] %v576
    // Predicated region
    $region58: #{tpu_custom_call.1} parent=1 // pred_check
      _
    $region59: #{tpu_custom_call.1} parent=1 // pred_check_branch
      %582 = sbr.rel (0) target = $region61
    $region60: #{tpu_custom_call.1} parent=1 // pred_region
      %s584 = ssub.s32 256, 256
      %585 = vsyncadd [#allocation4], %s584
      %s586 = sshll.u32 [#allocation11], 4
      %s587 = int_to_ptr.vmem [resolvable:$true] %s586
      %592 = dma.vmem_to_hbm [thread:$0]  %s587, 256, %s9, [#allocation4], 128, 128, 8
    $region61: #{tpu_custom_call.1} parent=1 // pred_fallthru
      _
    // Predicated region
    $region62: #{tpu_custom_call.1} parent=1 // pred_check
      _
    $region63: #{tpu_custom_call.1} parent=1 // pred_check_branch
      %594 = sbr.rel (0) target = $region65
    $region64: #{tpu_custom_call.1} parent=1 // pred_region
      %595 = dma.done [#allocation4], 256
    $region65: #{tpu_custom_call.1} parent=1 // pred_fallthru
      _
    %596 = vsyncpa [#allocation3], 1
    %597 = vsyncpa [#allocation6], 1
    %598 = vsyncpa [#allocation9], 1
    %599 = vsyncpa [#allocation4], 1

</llo_original>
